<compile_context>
chip_gen: v6e
topology: v6e:2x2x1
jax: 0.10.0
libtpu: 0.0.40
codegen_flags: <defaults>
</compile_context>

<pallas_src>
import functools

import jax
import jax.numpy as jnp
import numpy as np
from jax.experimental import pallas as pl
from jax.experimental.pallas import tpu as pltpu


def _round_up(x, m):
    return ((x + m - 1) // m) * m


def _ceil_div(a, b):
    return -(-a // b)


# ----------------------------------------------------------------------------
# Fused kernel: o = W2 @ relu(W1 @ x + b1) + b2, channels-first, one HBM pass
# ----------------------------------------------------------------------------
def _att_shrink_kernel(x_ref, w1_ref, b1_ref, w2_ref, b2_ref, o_ref):
    # x:  (1, C, TN) f32   w1: (C, C) bf16      b1: (C, 1) f32
    # w2: (Cout, C) bf16   b2: (Cout, 1) f32    o:  (1, Cout, TN) f32
    x = x_ref[0].astype(jnp.bfloat16)                       # in-kernel cast (VPU)
    h = jnp.dot(w1_ref[...], x, preferred_element_type=jnp.float32)
    h = jnp.maximum(h + b1_ref[...], 0.0)                   # folded BN bias + ReLU
    y = jnp.dot(w2_ref[...], h.astype(jnp.bfloat16),
                preferred_element_type=jnp.float32)
    o_ref[0] = (y + b2_ref[...]).astype(o_ref.dtype)


def att_shrink_forward(x, params, *, tile_n=1024, eps=1e-5, training=False):
    """AttShrink forward.  x: (B, C, T, V) f32 -> (B, Cout, T, Vv, Vv) f32.

    params follow PyTorch layout: conv_w (C, C) = (out, in), shrink_w (Cout, C),
    shrink_b (Cout,), BN stats (C,).
    """
    if training:
        # TODO(synk): training-mode dropout / BN batch statistics not implemented.
        raise NotImplementedError("AttShrink Pallas kernel is inference-only.")

    B, C, T, V = x.shape
    Vv = int(round(V ** 0.5))
    N = T * V

    # ---- fold eval-mode BatchNorm into the bias-free 1x1 conv (in f32) ------
    scale = params["bn_gamma"] / jnp.sqrt(params["bn_var"] + eps)       # (C,)
    w1 = (params["conv_w"] * scale[:, None]).astype(jnp.bfloat16)       # (C, C)
    b1 = (params["bn_beta"] - params["bn_mean"] * scale)
    b1 = b1.astype(jnp.float32).reshape(C, 1)

    w2 = params["shrink_w"].astype(jnp.bfloat16)                        # (Cout, C)
    Cout = params["shrink_w"].shape[0]
    b2 = params["shrink_b"].astype(jnp.float32).reshape(Cout, 1)

    # ---- channels-first, fused T*V axis (free reshape, no transpose) --------
    xr = x.reshape(B, C, N)

    # ---- tiling along the lane (T*V) axis ------------------------------------
    Np = _round_up(N, 128)                               # lane-dense requirement
    cap = min(_round_up(tile_n, 128), Np)                # per-tile column cap
    n_tiles = _ceil_div(Np, cap)
    TN = _round_up(_ceil_div(Np, n_tiles), 128)          # bounded padding waste
    grid_n = _ceil_div(Np, TN)
    Npad = grid_n * TN
    if Npad != N:
        xr = jnp.pad(xr, ((0, 0), (0, 0), (0, Npad - N)))

    out = pl.pallas_call(
        _att_shrink_kernel,
        out_shape=jax.ShapeDtypeStruct((B, Cout, Npad), jnp.float32),
        grid=(B, grid_n),
        in_specs=[
            pl.BlockSpec((1, C, TN), lambda b, n: (b, 0, n)),   # activation tile
            pl.BlockSpec((C, C), lambda b, n: (0, 0)),          # folded conv+BN W
            pl.BlockSpec((C, 1), lambda b, n: (0, 0)),          # folded BN bias
            pl.BlockSpec((Cout, C), lambda b, n: (0, 0)),       # shrink weight
            pl.BlockSpec((Cout, 1), lambda b, n: (0, 0)),       # shrink bias
        ],
        out_specs=pl.BlockSpec((1, Cout, TN), lambda b, n: (b, 0, n)),
        compiler_params=pltpu.CompilerParams(
            dimension_semantics=("parallel", "parallel"),
        ),
    )(xr, w1, b1, w2, b2)

    if Npad != N:
        out = out[:, :, :N]
    return out.reshape(B, Cout, T, Vv, Vv)               # view(B, -1, T, Vv, Vv)


# ----------------------------------------------------------------------------
# Pure-JAX reference (sanity check only)
# ----------------------------------------------------------------------------
def att_shrink_reference(x, params, eps=1e-5):
    B, C, T, V = x.shape
    Vv = int(round(V ** 0.5))
    scale = params["bn_gamma"] / jnp.sqrt(params["bn_var"] + eps)
    h = jnp.einsum("oc,bctv->botv", params["conv_w"], x)
    h = (h - params["bn_mean"][None, :, None, None]) * scale[None, :, None, None] \
        + params["bn_beta"][None, :, None, None]
    h = jnp.maximum(h, 0.0)
    y = jnp.einsum("oc,bctv->botv", params["shrink_w"], h) \
        + params["shrink_b"][None, :, None, None]
    return y.reshape(B, -1, T, Vv, Vv)


# ----------------------------------------------------------------------------
# main
# ----------------------------------------------------------------------------
if __name__ == "__main__":
    B, C_in, C_out, T, V = 2, 32, 16, 8, 16   # V = 4*4, so Vv = 4
    key = jax.random.PRNGKey(0)
    ks = jax.random.split(key, 8)

    # PyTorch Conv2d weight layout: (C_out, C_in) after squeezing the 1x1 taps.
    params = dict(
        conv_w=0.1 * jax.random.normal(ks[0], (C_in, C_in), jnp.float32),
        bn_gamma=1.0 + 0.05 * jax.random.normal(ks[1], (C_in,), jnp.float32),
        bn_beta=0.05 * jax.random.normal(ks[2], (C_in,), jnp.float32),
        bn_mean=0.05 * jax.random.normal(ks[3], (C_in,), jnp.float32),
        bn_var=1.0 + 0.05 * jax.random.uniform(ks[4], (C_in,), jnp.float32),
        shrink_w=0.1 * jax.random.normal(ks[5], (C_out, C_in), jnp.float32),
        shrink_b=0.05 * jax.random.normal(ks[6], (C_out,), jnp.float32),
    )
    x = jax.random.normal(ks[7], (B, C_in, T, V), jnp.float32)

    fwd = jax.jit(functools.partial(att_shrink_forward, params=params))
    out = fwd(x)
    jax.block_until_ready(out)

    assert out.shape == (B, C_out, T, 4, 4), out.shape

    ref = att_shrink_reference(x, params)
    np.testing.assert_allclose(np.asarray(out), np.asarray(ref),
                               rtol=5e-2, atol=5e-2)

    print("KERNEL_OK")
</pallas_src>

<mosaic_0001>
module attributes {stable_mosaic.version = 11 : i64} {
  func.func @_att_shrink_kernel(%arg0: i32, %arg1: i32, %arg2: memref<1x32x128xf32, #tpu.memory_space<vmem>>, %arg3: memref<32x32xbf16, #tpu.memory_space<vmem>>, %arg4: memref<32x1xf32, #tpu.memory_space<vmem>>, %arg5: memref<16x32xbf16, #tpu.memory_space<vmem>>, %arg6: memref<16x1xf32, #tpu.memory_space<vmem>>, %arg7: memref<1x16x128xf32, #tpu.memory_space<vmem>>) attributes {dimension_semantics = [#tpu.dimension_semantics<parallel>, #tpu.dimension_semantics<parallel>], iteration_bounds = array<i64: 2, 1>, scalar_prefetch = 0 : i64, scratch_operands = 0 : i64, tpu.core_type = #tpu.core_type<tc>, window_params = [{transform_indices = @transform_0, window_bounds = array<i64: 1, 32, 128>}, {pipeline_mode = #tpu.pipeline_mode<synchronous>, transform_indices = @transform_1, window_bounds = array<i64: 32, 32>}, {pipeline_mode = #tpu.pipeline_mode<synchronous>, transform_indices = @transform_2, window_bounds = array<i64: 32, 1>}, {pipeline_mode = #tpu.pipeline_mode<synchronous>, transform_indices = @transform_3, window_bounds = array<i64: 16, 32>}, {pipeline_mode = #tpu.pipeline_mode<synchronous>, transform_indices = @transform_4, window_bounds = array<i64: 16, 1>}, {transform_indices = @transform_5, window_bounds = array<i64: 1, 16, 128>}]} {
    %c0 = arith.constant 0 : index
    %c0_0 = arith.constant 0 : index
    %c0_1 = arith.constant 0 : index
    %0 = vector.load %arg2[%c0, %c0_0, %c0_1] : memref<1x32x128xf32, #tpu.memory_space<vmem>>, vector<1x32x128xf32>
    %1 = vector.shape_cast %0 : vector<1x32x128xf32> to vector<32x128xf32>
    %2 = arith.truncf %1 : vector<32x128xf32> to vector<32x128xbf16>
    %c0_2 = arith.constant 0 : index
    %c0_3 = arith.constant 0 : index
    %3 = vector.load %arg3[%c0_2, %c0_3] : memref<32x32xbf16, #tpu.memory_space<vmem>>, vector<32x32xbf16>
    %cst = arith.constant dense<0.000000e+00> : vector<32x128xf32>
    %4 = tpu.matmul %3, %2, %cst {dimension_numbers = #tpu.dot_dimension_numbers<[1], [0], [0], [1], [0, 0, 1, 1], [], []>} : vector<32x32xbf16>, vector<32x128xbf16>, vector<32x128xf32> -> vector<32x128xf32>
    %c0_4 = arith.constant 0 : index
    %c0_5 = arith.constant 0 : index
    %5 = vector.load %arg4[%c0_4, %c0_5] : memref<32x1xf32, #tpu.memory_space<vmem>>, vector<32x1xf32>
    %6 = vector.broadcast %5 : vector<32x1xf32> to vector<32x128xf32>
    %7 = arith.addf %4, %6 : vector<32x128xf32>
    %cst_6 = arith.constant 0.000000e+00 : f32
    %8 = vector.broadcast %cst_6 : f32 to vector<32x128xf32>
    %9 = arith.maximumf %7, %8 : vector<32x128xf32>
    %c0_7 = arith.constant 0 : index
    %c0_8 = arith.constant 0 : index
    %10 = vector.load %arg5[%c0_7, %c0_8] : memref<16x32xbf16, #tpu.memory_space<vmem>>, vector<16x32xbf16>
    %11 = arith.truncf %9 : vector<32x128xf32> to vector<32x128xbf16>
    %cst_9 = arith.constant dense<0.000000e+00> : vector<16x128xf32>
    %12 = tpu.matmul %10, %11, %cst_9 {dimension_numbers = #tpu.dot_dimension_numbers<[1], [0], [0], [1], [0, 0, 1, 1], [], []>} : vector<16x32xbf16>, vector<32x128xbf16>, vector<16x128xf32> -> vector<16x128xf32>
    %c0_10 = arith.constant 0 : index
    %c0_11 = arith.constant 0 : index
    %13 = vector.load %arg6[%c0_10, %c0_11] : memref<16x1xf32, #tpu.memory_space<vmem>>, vector<16x1xf32>
    %14 = vector.broadcast %13 : vector<16x1xf32> to vector<16x128xf32>
    %15 = arith.addf %12, %14 : vector<16x128xf32>
    %c0_12 = arith.constant 0 : index
    %c0_13 = arith.constant 0 : index
    %c0_14 = arith.constant 0 : index
    %16 = vector.load %arg7[%c0_12, %c0_13, %c0_14] : memref<1x16x128xf32, #tpu.memory_space<vmem>>, vector<1x16x128xf32>
    %17 = vector.shape_cast %16 : vector<1x16x128xf32> to vector<16x128xf32>
    %18 = vector.shape_cast %15 : vector<16x128xf32> to vector<1x16x128xf32>
    tpu.vector_store %arg7[%c0_12, %c0_13, %c0_14], %18 {strides = array<i32>} : memref<1x16x128xf32, #tpu.memory_space<vmem>>, vector<1x16x128xf32>,
    return
  }
  func.func @transform_0(%arg0: i32, %arg1: i32) -> (i32, i32, i32) {
    %c0_i32 = arith.constant 0 : i32
    %c0_i32_0 = arith.constant 0 : i32
    return %arg0, %c0_i32, %arg1 : i32, i32, i32
  }
  func.func @transform_1(%arg0: i32, %arg1: i32) -> (i32, i32) {
    %c0_i32 = arith.constant 0 : i32
    %c0_i32_0 = arith.constant 0 : i32
    %c0_i32_1 = arith.constant 0 : i32
    return %c0_i32, %c0_i32_0 : i32, i32
  }
  func.func @transform_2(%arg0: i32, %arg1: i32) -> (i32, i32) {
    %c0_i32 = arith.constant 0 : i32
    %c0_i32_0 = arith.constant 0 : i32
    %c0_i32_1 = arith.constant 0 : i32
    return %c0_i32, %c0_i32_0 : i32, i32
  }
  func.func @transform_3(%arg0: i32, %arg1: i32) -> (i32, i32) {
    %c0_i32 = arith.constant 0 : i32
    %c0_i32_0 = arith.constant 0 : i32
    %c0_i32_1 = arith.constant 0 : i32
    return %c0_i32, %c0_i32_0 : i32, i32
  }
  func.func @transform_4(%arg0: i32, %arg1: i32) -> (i32, i32) {
    %c0_i32 = arith.constant 0 : i32
    %c0_i32_0 = arith.constant 0 : i32
    %c0_i32_1 = arith.constant 0 : i32
    return %c0_i32, %c0_i32_0 : i32, i32
  }
  func.func @transform_5(%arg0: i32, %arg1: i32) -> (i32, i32, i32) {
    %c0_i32 = arith.constant 0 : i32
    %c0_i32_0 = arith.constant 0 : i32
    return %arg0, %c0_i32, %arg1 : i32, i32, i32
  }
}

</mosaic_0001>

<llo_original>
// kernel: att_shrink_forward.1
$region0: #{att_shrink_forward.1}
  #allocation0 [shape = 'u32[]', space=smem, size = 0x4, offset = 0x4, fixed_abs, tag = 'smem constant byte address 0x4 - core index']
  #allocation1 [shape = 'u32[144,128]{1,0:T(1,128)}', space=vmem, size = 0x12000, scoped, tag = 'internal scratch']
  %s0 = inlined_call_operand.vmem [shape: f32[2,32,128], index: 0, kind: input, shape index: {}]
  %s1 = inlined_call_operand.vmem [shape: bf16[32,32], index: 1, kind: input, shape index: {}]
  %s2 = inlined_call_operand.vmem [shape: f32[32,1], index: 2, kind: input, shape index: {}]
  %s3 = inlined_call_operand.vmem [shape: bf16[16,32], index: 3, kind: input, shape index: {}]
  %s4 = inlined_call_operand.vmem [shape: f32[16,1], index: 4, kind: input, shape index: {}]
  %s5 = inlined_call_operand.vmem [shape: f32[2,16,128], index: 5, kind: output, shape index: {}]
  %s6 = sld [smem:[#allocation0]]
  $region53: #{att_shrink_forward.1} parent=0
    _
  %s8 = ssub.s32 1, %s6
  %s9 = scalar_select 0, %s8, %s6
  loop: start=0, step=1, limit=4
  $region2: #{att_shrink_forward.1} parent=0 // loop_pre_header
    _
  $region3: #{att_shrink_forward.1} parent=0 // loop_header
    %s11 = sphi 0, %s15
    %p12 = scmp.ge.s32.totalorder %s11, 4
    %s18 = sphi 0, %s30
    %s19 = sphi 0, %s26
    %s20 = sphi 0, %s18
    %s21 = sphi 0, %s19
    %s22 = sphi 0, %s20
    %s23 = sphi 0, %s21
    %s35 = sphi 0, %s37
    %s38 = sphi 0, %s35
    %s39 = sphi 0, %s38
    %s55 = sphi 0, %s39
    %s59 = sphi 0, %s59
    %s61 = sphi 0, %s59
    %s62 = sphi 0, %s61
    %s76 = sphi 0, %s62
    %s80 = sphi 0, %s80
    %s82 = sphi 0, %s80
    %s83 = sphi 0, %s82
    %s97 = sphi 0, %s83
    %s101 = sphi 0, %s101
    %s103 = sphi 0, %s101
    %s104 = sphi 0, %s103
    %s118 = sphi 0, %s104
    %s122 = sphi 0, %s122
    %s124 = sphi 0, %s122
    %s125 = sphi 0, %s124
    %s139 = sphi 0, %s125
    %s147 = sphi 0, %s149
    %s150 = sphi 0, %s147
    %s151 = sphi 0, %s150
    %s167 = sphi 0, %s151
  $region4: #{att_shrink_forward.1} parent=0 // loop_header_branch
    %14 = sbr.rel (%p12) target = $region8
  $region5: #{att_shrink_forward.1} parent=0 // loop_body
    %s16 = ssub.s32 %s11, 1
    %s17 = ssub.s32 %s11, 2
    %s24 = sadd.s32 1, %s19
    %p25 = scmp.ge.s32.totalorder %s24, 1
    %s26 = scalar_select %p25, 0, %s24
    %s27 = sadd.s32 1, %s18
    %s28 = scalar_select %p25, %s27, %s18
    %p29 = scmp.ge.s32.totalorder %s28, 2
    %s30 = scalar_select %p29, 0, %s28
    %s31 = ssub.s32 %s18, %s30
    %s32 = ssub.s32 %s19, %s26
    %s33 = sor.u32 %s31, %s32
    %p34 = scmp.eq.s32.totalorder %s33, 0
    %s36 = sadd.s32 %s35, 1
    %s37 = scalar_select %p34, %s35, %s36
    %p40 = pneg %p34
    %p41 = scmp.eq.s32.totalorder %s11, 1
    %p42 = por %p40, %p41
    %p43 = scmp.ne.s32.totalorder %s35, %s38
    %p44 = scmp.eq.s32.totalorder %s11, 0
    %p45 = por %p43, %p44
    %p46 = scmp.ne.s32.totalorder %s35, %s38
    %p47 = scmp.eq.s32.totalorder %s16, 1
    %p48 = por %p46, %p47
    %p49 = scmp.ne.s32.totalorder %s38, %s39
    %p50 = scmp.eq.s32.totalorder %s16, 0
    %p51 = por %p49, %p50
    %p52 = scmp.ne.s32.totalorder %s38, %s39
    %p53 = scmp.eq.s32.totalorder %s17, 1
    %p54 = por %p52, %p53
    %p56 = scmp.ne.s32.totalorder %s39, %s55
    %p57 = scmp.eq.s32.totalorder %s17, 0
    %p58 = por %p56, %p57
    %s60 = sadd.s32 %s59, 1
    %p63 = scmp.eq.s32.totalorder %s11, 1
    %p64 = scmp.ne.s32.totalorder %s59, %s61
    %p65 = scmp.eq.s32.totalorder %s11, 0
    %p66 = por %p64, %p65
    %p67 = scmp.ne.s32.totalorder %s59, %s61
    %p68 = scmp.eq.s32.totalorder %s16, 1
    %p69 = por %p67, %p68
    %p70 = scmp.ne.s32.totalorder %s61, %s62
    %p71 = scmp.eq.s32.totalorder %s16, 0
    %p72 = por %p70, %p71
    %p73 = scmp.ne.s32.totalorder %s61, %s62
    %p74 = scmp.eq.s32.totalorder %s17, 1
    %p75 = por %p73, %p74
    %p77 = scmp.ne.s32.totalorder %s62, %s76
    %p78 = scmp.eq.s32.totalorder %s17, 0
    %p79 = por %p77, %p78
    %s81 = sadd.s32 %s80, 1
    %p84 = scmp.eq.s32.totalorder %s11, 1
    %p85 = scmp.ne.s32.totalorder %s80, %s82
    %p86 = scmp.eq.s32.totalorder %s11, 0
    %p87 = por %p85, %p86
    %p88 = scmp.ne.s32.totalorder %s80, %s82
    %p89 = scmp.eq.s32.totalorder %s16, 1
    %p90 = por %p88, %p89
    %p91 = scmp.ne.s32.totalorder %s82, %s83
    %p92 = scmp.eq.s32.totalorder %s16, 0
    %p93 = por %p91, %p92
    %p94 = scmp.ne.s32.totalorder %s82, %s83
    %p95 = scmp.eq.s32.totalorder %s17, 1
    %p96 = por %p94, %p95
    %p98 = scmp.ne.s32.totalorder %s83, %s97
    %p99 = scmp.eq.s32.totalorder %s17, 0
    %p100 = por %p98, %p99
    %s102 = sadd.s32 %s101, 1
    %p105 = scmp.eq.s32.totalorder %s11, 1
    %p106 = scmp.ne.s32.totalorder %s101, %s103
    %p107 = scmp.eq.s32.totalorder %s11, 0
    %p108 = por %p106, %p107
    %p109 = scmp.ne.s32.totalorder %s101, %s103
    %p110 = scmp.eq.s32.totalorder %s16, 1
    %p111 = por %p109, %p110
    %p112 = scmp.ne.s32.totalorder %s103, %s104
    %p113 = scmp.eq.s32.totalorder %s16, 0
    %p114 = por %p112, %p113
    %p115 = scmp.ne.s32.totalorder %s103, %s104
    %p116 = scmp.eq.s32.totalorder %s17, 1
    %p117 = por %p115, %p116
    %p119 = scmp.ne.s32.totalorder %s104, %s118
    %p120 = scmp.eq.s32.totalorder %s17, 0
    %p121 = por %p119, %p120
    %s123 = sadd.s32 %s122, 1
    %p126 = scmp.eq.s32.totalorder %s11, 1
    %p127 = scmp.ne.s32.totalorder %s122, %s124
    %p128 = scmp.eq.s32.totalorder %s11, 0
    %p129 = por %p127, %p128
    %p130 = scmp.ne.s32.totalorder %s122, %s124
    %p131 = scmp.eq.s32.totalorder %s16, 1
    %p132 = por %p130, %p131
    %p133 = scmp.ne.s32.totalorder %s124, %s125
    %p134 = scmp.eq.s32.totalorder %s16, 0
    %p135 = por %p133, %p134
    %p136 = scmp.ne.s32.totalorder %s124, %s125
    %p137 = scmp.eq.s32.totalorder %s17, 1
    %p138 = por %p136, %p137
    %p140 = scmp.ne.s32.totalorder %s125, %s139
    %p141 = scmp.eq.s32.totalorder %s17, 0
    %p142 = por %p140, %p141
    %s143 = ssub.s32 %s18, %s30
    %s144 = ssub.s32 %s19, %s26
    %s145 = sor.u32 %s143, %s144
    %p146 = scmp.eq.s32.totalorder %s145, 0
    %s148 = sadd.s32 %s147, 1
    %s149 = scalar_select %p146, %s147, %s148
    %p152 = pneg %p146
    %p153 = scmp.eq.s32.totalorder %s11, 1
    %p154 = por %p152, %p153
    %p155 = scmp.ne.s32.totalorder %s147, %s150
    %p156 = scmp.eq.s32.totalorder %s11, 0
    %p157 = por %p155, %p156
    %p158 = scmp.ne.s32.totalorder %s147, %s150
    %p159 = scmp.eq.s32.totalorder %s16, 1
    %p160 = por %p158, %p159
    %p161 = scmp.ne.s32.totalorder %s150, %s151
    %p162 = scmp.eq.s32.totalorder %s16, 0
    %p163 = por %p161, %p162
    %p164 = scmp.ne.s32.totalorder %s150, %s151
    %p165 = scmp.eq.s32.totalorder %s17, 1
    %p166 = por %p164, %p165
    %p168 = scmp.ne.s32.totalorder %s151, %s167
    %p169 = scmp.eq.s32.totalorder %s17, 0
    %p170 = por %p168, %p169
    %p171 = scmp.le.s32.totalorder 1, %s11
    %p172 = scmp.lt.s32.totalorder %s11, 3
    %p173 = pnand %p171, %p172
    %p174 = pneg %p173
    // Predicated region
    $region9: #{att_shrink_forward.1} parent=5 // pred_check
      _
    $region10: #{att_shrink_forward.1} parent=5 // pred_check_branch
      %176 = sbr.rel (%p173) target = $region12
    $region11: #{att_shrink_forward.1} parent=5 // pred_region
      %s177 = ssub.s32 %s11, 1
      // Predicated region
      $region13: #{att_shrink_forward.1} parent=11 // pred_check
        %p178 = pneg %p72
      $region14: #{att_shrink_forward.1} parent=11 // pred_check_branch
        %180 = sbr.rel (%p178) target = $region16
      $region15: #{att_shrink_forward.1} parent=11 // pred_region
        _
      $region16: #{att_shrink_forward.1} parent=11 // pred_fallthru
        _
      // Predicated region
      $region17: #{att_shrink_forward.1} parent=11 // pred_check
        %p181 = pneg %p93
      $region18: #{att_shrink_forward.1} parent=11 // pred_check_branch
        %183 = sbr.rel (%p181) target = $region20
      $region19: #{att_shrink_forward.1} parent=11 // pred_region
        _
      $region20: #{att_shrink_forward.1} parent=11 // pred_fallthru
        _
      // Predicated region
      $region21: #{att_shrink_forward.1} parent=11 // pred_check
        %p184 = pneg %p114
      $region22: #{att_shrink_forward.1} parent=11 // pred_check_branch
        %186 = sbr.rel (%p184) target = $region24
      $region23: #{att_shrink_forward.1} parent=11 // pred_region
        _
      $region24: #{att_shrink_forward.1} parent=11 // pred_fallthru
        _
      // Predicated region
      $region25: #{att_shrink_forward.1} parent=11 // pred_check
        %p187 = pneg %p135
      $region26: #{att_shrink_forward.1} parent=11 // pred_check_branch
        %189 = sbr.rel (%p187) target = $region28
      $region27: #{att_shrink_forward.1} parent=11 // pred_region
        _
      $region28: #{att_shrink_forward.1} parent=11 // pred_fallthru
        _
    $region12: #{att_shrink_forward.1} parent=5 // pred_fallthru
      _
    %p190 = scmp.lt.s32.totalorder %s11, 2
    // Predicated region
    $region29: #{att_shrink_forward.1} parent=5 // pred_check
      %p191 = pneg %p190
    $region30: #{att_shrink_forward.1} parent=5 // pred_check_branch
      %193 = sbr.rel (%p191) target = $region32
    $region31: #{att_shrink_forward.1} parent=5 // pred_region
      // Predicated region
      $region33: #{att_shrink_forward.1} parent=31 // pred_check
        %p194 = pneg %p45
      $region34: #{att_shrink_forward.1} parent=31 // pred_check_branch
        %196 = sbr.rel (%p194) target = $region36
      $region35: #{att_shrink_forward.1} parent=31 // pred_region
        %p197 = scmp.lt.s32.totalorder %s18, 1
        %s198 = scalar_select %p197, %s18, 1
        %p199 = scmp.lt.s32.totalorder %s19, 0
        %s200 = scalar_select %p199, %s19, 0
        %s201 = smul.addr %s198, 4
        %s202 = sadd.s32 %s200, %s201
        %s203 = smul.addr %s202, 8
        %s204 = scalar_lea.vmem %s0, %s203
      $region36: #{att_shrink_forward.1} parent=31 // pred_fallthru
        _
    $region32: #{att_shrink_forward.1} parent=5 // pred_fallthru
      _
    %p205 = scmp.le.s32.totalorder 1, %s11
    %p206 = scmp.lt.s32.totalorder %s11, 3
    %p207 = pnand %p205, %p206
    %p208 = pneg %p207
    // Predicated region
    $region37: #{att_shrink_forward.1} parent=5 // pred_check
      _
    $region38: #{att_shrink_forward.1} parent=5 // pred_check_branch
      %210 = sbr.rel (%p207) target = $region40
    $region39: #{att_shrink_forward.1} parent=5 // pred_region
      %s211 = ssub.s32 %s11, 1
      %p212 = scmp.lt.s32.totalorder %s20, 1
      %s213 = scalar_select %p212, %s20, 1
      %p214 = scmp.lt.s32.totalorder %s21, 0
      %s215 = scalar_select %p214, %s21, 0
      %s216 = smul.addr %s213, 4
      %s217 = sadd.s32 %s215, %s216
      %s218 = smul.addr %s217, 8
      %s219 = scalar_lea.vmem %s0, %s218
      %p220 = pneg %p51
      %p221 = pneg %p48
      %p222 = pneg %p72
      %p223 = pneg %p69
      %p224 = pneg %p93
      %p225 = pneg %p90
      %p226 = pneg %p114
      %p227 = pneg %p111
      %p228 = pneg %p135
      %p229 = pneg %p132
      %p230 = pneg %p163
      %p231 = pneg %p160
      %p232 = scmp.lt.s32.totalorder %s20, 1
      %s233 = scalar_select %p232, %s20, 1
      %p234 = scmp.lt.s32.totalorder %s21, 0
      %s235 = scalar_select %p234, %s21, 0
      %s236 = smul.addr %s233, 2
      %s237 = sadd.s32 %s235, %s236
      %s238 = smul.addr %s237, 8
      %s239 = scalar_lea.vmem %s5, %s238
      %p240 = scmp.lt.s32.totalorder %s20, 1
      %s241 = scalar_select %p240, %s20, 1
      %p242 = scmp.lt.s32.totalorder %s21, 0
      %s243 = scalar_select %p242, %s21, 0
      %s244 = smul.addr %s241, 4
      %s245 = sadd.s32 %s243, %s244
      %s246 = smul.addr %s245, 8
      %s247 = scalar_lea.vmem %s0, %s246
      %p248 = scmp.lt.s32.totalorder %s20, 1
      %s249 = scalar_select %p248, %s20, 1
      %p250 = scmp.lt.s32.totalorder %s21, 0
      %s251 = scalar_select %p250, %s21, 0
      %s252 = smul.addr %s249, 2
      %s253 = sadd.s32 %s251, %s252
      %s254 = smul.addr %s253, 8
      %s255 = scalar_lea.vmem %s5, %s254
      %v257 = vld [vmem:[%s247] sm:$0xff]
      %v258 = vld [vmem:[%s247 + $0x8] sm:$0xff]
      %v259 = vld [vmem:[%s247 + $0x10] sm:$0xff]
      %v260 = vld [vmem:[%s247 + $0x18] sm:$0xff]
      %v261 = vpack.c.bf16 %v258, %v257
      %v262 = vpack.c.bf16 %v260, %v259
      %v263 = vld [vmem:[%s1] sm:$0xf]
      %v264 = vld [vmem:[%s1 + $0x4] sm:$0xf]
      %v265 = vld [vmem:[%s1 + $0x8] sm:$0xf]
      %v266 = vld [vmem:[%s1 + $0xc] sm:$0xf]
      %v267 = vld [vmem:[%s2] sm:$0xff]
      %v268 = vld [vmem:[%s2 + $0x8] sm:$0xff]
      %v269 = vld [vmem:[%s2 + $0x10] sm:$0xff]
      %v270 = vld [vmem:[%s2 + $0x18] sm:$0xff]
      %272 = vset.pattern.permute.xlu0 0
      %273 = vperm.xlu0 %272, %v267
      %v274 = vpop.permute.xlu0 %273
      %277 = vset.pattern.permute.xlu0 0
      %278 = vperm.xlu0 %277, %v268
      %v279 = vpop.permute.xlu0 %278
      %282 = vset.pattern.permute.xlu0 0
      %283 = vperm.xlu0 %282, %v269
      %v284 = vpop.permute.xlu0 %283
      %287 = vset.pattern.permute.xlu0 0
      %288 = vperm.xlu0 %287, %v270
      %v289 = vpop.permute.xlu0 %288
      %v295 = vunpack.c.l.b16 %v263
      %v296 = vunpack.c.l.b16 %v264
      %v297 = vunpack.c.l.b16 %v265
      %v298 = vunpack.c.l.b16 %v266
      %v299 = vpack.c.b16 %v296, %v295
      %v300 = vpack.c.b16 %v298, %v297
      %vm301 = vcmask 261120
      %v303 = vsel %vm301, %v299, 0
      %v306 = vsel %vm301, %v300, 0
      %308 = vmatprep.subr.bf16.mxu0 0
      %309 = vmatpush1.bf16.msra.mxu0 0
      %310 = vmatprep.subr.bf16.mxu0 0
      %311 = vmatpush1.bf16.msra.mxu0 0
      %312 = vmatprep.subr.bf16.mxu0 0
      %313 = vmatpush1.bf16.msra.mxu0 0
      %314 = vmatprep.subr.bf16.mxu0 0
      %315 = vmatpush1.bf16.msra.mxu0 0
      %316 = vmatprep.subr.bf16.mxu0 0
      %317 = vmatpush1.bf16.msra.mxu0 0
      %318 = vmatprep.subr.bf16.mxu0 0
      %319 = vmatpush1.bf16.msra.mxu0 0
      %320 = vmatprep.subr.bf16.mxu0 0
      %321 = vmatpush1.bf16.msra.mxu0 %v262
      %322 = vmatprep.subr.bf16.mxu0 0
      %323 = vmatpush1.bf16.msra.mxu0 %v261
      %324 = vmatprep.subr.bf16.mxu0 0
      %325 = vmatpush2.bf16.msra.mxu0 0
      %326 = vmatprep.subr.bf16.mxu0 0
      %327 = vmatpush2.bf16.msra.mxu0 0
      %328 = vmatprep.subr.bf16.mxu0 0
      %329 = vmatpush2.bf16.msra.mxu0 0
      %330 = vmatprep.subr.bf16.mxu0 0
      %331 = vmatpush2.bf16.msra.mxu0 0
      %332 = vmatprep.subr.bf16.mxu0 0
      %333 = vmatpush2.bf16.msra.mxu0 0
      %334 = vmatprep.subr.bf16.mxu0 0
      %335 = vmatpush2.bf16.msra.mxu0 0
      %336 = vmatprep.subr.bf16.mxu0 0
      %337 = vmatpush2.bf16.msra.mxu0 0
      %338 = vmatprep.subr.bf16.mxu0 0
      %339 = vmatpush2.bf16.msra.mxu0 0
      %340 = vmatprep.mubr.bf16.mxu0 0
      %341 = vmatmul.mubr.bf16.gmra.mxu0 %v303
      %v342 = vpop.f32.mrf.mxu0
      %v343 = vadd.f32 %v274, %v342
      %v344 = vpop.f32.mrf.mxu0
      %v345 = vpop.f32.mrf.mxu0
      %v346 = vadd.f32 %v279, %v345
      %v347 = vpop.f32.mrf.mxu0
      %348 = vmatprep.mubr.bf16.mxu0 0
      %349 = vmatmul.mubr.bf16.gmra.mxu0 %v306
      %v350 = vpop.f32.mrf.mxu0
      %v351 = vadd.f32 %v284, %v350
      %v352 = vpop.f32.mrf.mxu0
      %v353 = vpop.f32.mrf.mxu0
      %v354 = vadd.f32 %v289, %v353
      %v355 = vpop.f32.mrf.mxu0
      %356 = vdwg.mxu0
      %v357 = vmax.f32 %v343, 0.0
      %v358 = vmax.f32 %v346, 0.0
      %v359 = vmax.f32 %v351, 0.0
      %v360 = vmax.f32 %v354, 0.0
      %v361 = vld [vmem:[%s3] sm:$0xf]
      %v362 = vld [vmem:[%s3 + $0x4] sm:$0xf]
      %v363 = vpack.c.bf16 %v358, %v357
      %v364 = vpack.c.bf16 %v360, %v359
      %v365 = vld [vmem:[%s4] sm:$0xff]
      %v366 = vld [vmem:[%s4 + $0x8] sm:$0xff]
      %368 = vset.pattern.permute.xlu0 0
      %369 = vperm.xlu0 %368, %v365
      %v370 = vpop.permute.xlu0 %369
      %373 = vset.pattern.permute.xlu0 0
      %374 = vperm.xlu0 %373, %v366
      %v375 = vpop.permute.xlu0 %374
      %v379 = vunpack.c.l.b16 %v361
      %v380 = vunpack.c.l.b16 %v362
      %v381 = vpack.c.b16 %v380, %v379
      %v383 = vsel %vm301, %v381, 0
      %385 = vmatprep.subr.bf16.mxu0 0
      %386 = vmatpush1.bf16.msra.mxu0 0
      %387 = vmatprep.subr.bf16.mxu0 0
      %388 = vmatpush1.bf16.msra.mxu0 0
      %389 = vmatprep.subr.bf16.mxu0 0
      %390 = vmatpush1.bf16.msra.mxu0 0
      %391 = vmatprep.subr.bf16.mxu0 0
      %392 = vmatpush1.bf16.msra.mxu0 0
      %393 = vmatprep.subr.bf16.mxu0 0
      %394 = vmatpush1.bf16.msra.mxu0 0
      %395 = vmatprep.subr.bf16.mxu0 0
      %396 = vmatpush1.bf16.msra.mxu0 0
      %397 = vmatprep.subr.bf16.mxu0 0
      %398 = vmatpush1.bf16.msra.mxu0 %v364
      %399 = vmatprep.subr.bf16.mxu0 0
      %400 = vmatpush1.bf16.msra.mxu0 %v363
      %401 = vmatprep.subr.bf16.mxu0 0
      %402 = vmatpush2.bf16.msra.mxu0 0
      %403 = vmatprep.subr.bf16.mxu0 0
      %404 = vmatpush2.bf16.msra.mxu0 0
      %405 = vmatprep.subr.bf16.mxu0 0
      %406 = vmatpush2.bf16.msra.mxu0 0
      %407 = vmatprep.subr.bf16.mxu0 0
      %408 = vmatpush2.bf16.msra.mxu0 0
      %409 = vmatprep.subr.bf16.mxu0 0
      %410 = vmatpush2.bf16.msra.mxu0 0
      %411 = vmatprep.subr.bf16.mxu0 0
      %412 = vmatpush2.bf16.msra.mxu0 0
      %413 = vmatprep.subr.bf16.mxu0 0
      %414 = vmatpush2.bf16.msra.mxu0 0
      %415 = vmatprep.subr.bf16.mxu0 0
      %416 = vmatpush2.bf16.msra.mxu0 0
      %417 = vmatprep.mubr.bf16.mxu0 0
      %418 = vmatmul.mubr.bf16.gmra.mxu0 %v383
      %v419 = vpop.f32.mrf.mxu0
      %v420 = vadd.f32 %v370, %v419
      %v421 = vpop.f32.mrf.mxu0
      %v422 = vpop.f32.mrf.mxu0
      %v423 = vadd.f32 %v375, %v422
      %v424 = vpop.f32.mrf.mxu0
      %425 = vdwg.mxu0
      %426 = vst [vmem:[%s255] sm:$0xff] %v420
      %427 = vst [vmem:[%s255 + $0x8] sm:$0xff] %v423
      %p428 = scmp.lt.s32.totalorder %s20, 1
      %s429 = scalar_select %p428, %s20, 1
      %p430 = scmp.lt.s32.totalorder %s21, 0
      %s431 = scalar_select %p430, %s21, 0
      %s432 = smul.addr %s429, 2
      %s433 = sadd.s32 %s431, %s432
      %s434 = smul.addr %s433, 8
      %s435 = scalar_lea.vmem %s5, %s434
      // Predicated region
      $region41: #{att_shrink_forward.1} parent=39 // pred_check
        %p436 = pneg %p160
      $region42: #{att_shrink_forward.1} parent=39 // pred_check_branch
        %438 = sbr.rel (%p436) target = $region44
      $region43: #{att_shrink_forward.1} parent=39 // pred_region
        _
      $region44: #{att_shrink_forward.1} parent=39 // pred_fallthru
        _
    $region40: #{att_shrink_forward.1} parent=5 // pred_fallthru
      _
    %p439 = scmp.le.s32.totalorder 2, %s11
    // Predicated region
    $region45: #{att_shrink_forward.1} parent=5 // pred_check
      %p440 = pneg %p439
    $region46: #{att_shrink_forward.1} parent=5 // pred_check_branch
      %442 = sbr.rel (%p440) target = $region48
    $region47: #{att_shrink_forward.1} parent=5 // pred_region
      %s443 = ssub.s32 %s11, 2
      // Predicated region
      $region49: #{att_shrink_forward.1} parent=47 // pred_check
        %p444 = pneg %p166
      $region50: #{att_shrink_forward.1} parent=47 // pred_check_branch
        %446 = sbr.rel (%p444) target = $region52
      $region51: #{att_shrink_forward.1} parent=47 // pred_region
        %p447 = scmp.lt.s32.totalorder %s22, 1
        %s448 = scalar_select %p447, %s22, 1
        %p449 = scmp.lt.s32.totalorder %s23, 0
        %s450 = scalar_select %p449, %s23, 0
        %s451 = smul.addr %s448, 2
        %s452 = sadd.s32 %s450, %s451
        %s453 = smul.addr %s452, 8
        %s454 = scalar_lea.vmem %s5, %s453
      $region52: #{att_shrink_forward.1} parent=47 // pred_fallthru
        _
    $region48: #{att_shrink_forward.1} parent=5 // pred_fallthru
      _
  $region6: #{att_shrink_forward.1} parent=0 // loop_footer
    %s15 = sadd.s32 1, %s11
  $region7: #{att_shrink_forward.1} parent=0 // loop_footer_branch
    %10 = sbr.rel target = $region3
  $region8: #{att_shrink_forward.1} parent=0 // loop_exit
    _

</llo_original>
